<compile_context>
chip_gen: v5e
topology: v5e:2x2
jax: 0.10.0
libtpu: 0.0.40
codegen_flags: <defaults>
</compile_context>

<pallas_src>
import math

import numpy as np

import jax
import jax.numpy as jnp
from jax.experimental import pallas as pl
from jax.experimental.pallas import tpu as pltpu


def _round_up(x: int, m: int) -> int:
    return ((x + m - 1) // m) * m


def _chip_profile():
    """Best-effort (vmem_capacity_bytes, is_megacore) with safe fallbacks."""
    vmem_cap = 64 << 20          # v7x per-core VMEM: safe lower bound everywhere
    megacore = False
    try:
        info = pltpu.get_tpu_info()
        vmem_cap = int(getattr(info, "vmem_capacity_bytes", vmem_cap)) or vmem_cap
    except Exception:
        pass
    try:
        dev = jax.devices()[0]
        kind = str(getattr(dev, "device_kind", "")).lower()
        cores = int(getattr(dev, "num_cores", 1) or 1)
        megacore = cores > 1 or ("v7" in kind) or ("7x" in kind)
    except Exception:
        pass
    return vmem_cap, megacore


def _make_mlp_kernel(n_hidden: int, matmul_dtype, use_mxu_last: bool, precision):
    """MLP kernel in lane-major (features x batch) layout."""
    dot_kwargs = {"preferred_element_type": jnp.float32}
    if precision is not None:
        dot_kwargs["precision"] = precision

    def kernel(x_ref, *refs):
        out_ref = refs[-1]
        prm = refs[:-1]  # (W0, b0, ..., W_{h-1}, b_{h-1}, w_last, b_last)

        # Row-major (block_m, F) tile -> lane-major (F, block_m) in-kernel.
        # Doing the transpose here (XLU has slack) removes the wrapper-side
        # HBM transpose pass entirely.
        h = x_ref[...].T
        if h.dtype != matmul_dtype:
            h = h.astype(matmul_dtype)

        for i in range(n_hidden):
            w = prm[2 * i][...]                       # (H_pad, K)  matmul_dtype
            b = prm[2 * i + 1][...]                   # (H_pad, 1)  f32
            z = jnp.dot(w, h, **dot_kwargs) + b       # MXU, f32 accumulation
            # ELU(alpha=1) in f32; clamp the exp arg so the discarded branch
            # can never overflow to inf.
            a = jnp.where(z > 0, z, jnp.exp(jnp.minimum(z, 0.0)) - 1.0)
            h = a.astype(matmul_dtype) if (i + 1 < n_hidden and
                                           a.dtype != matmul_dtype) else a

        w_last = prm[2 * n_hidden][...]
        b_last = prm[2 * n_hidden + 1][...]           # (1, 1) f32
        if use_mxu_last:
            # (1, H_pad) @ (H_pad, block_m) on the otherwise-idle MXU.
            hh = h.astype(w_last.dtype) if h.dtype != w_last.dtype else h
            v = jnp.dot(w_last, hh, **dot_kwargs) + b_last
        else:
            # Tiny hidden: VPU broadcast-multiply + sublane (XLU) reduce, f32.
            v = jnp.sum(h * w_last, axis=0, keepdims=True) + b_last
        out_ref[...] = v.astype(out_ref.dtype)        # lane-dense, unmasked store

    return kernel


def vnet_forward(feature, params, *, block_m=None, matmul_dtype=jnp.bfloat16,
                 out_dtype=jnp.float32):
    """VNet forward pass.

    feature: [B, feature_dim]  (f32, or already-bf16 to halve HBM traffic)
    params:  list of (W [out, in], b [out]) in PyTorch nn.Linear layout;
             the last layer has out == 1.
    Returns: [B, 1] out_dtype.
    """
    B, F = feature.shape
    n_linear = len(params)
    n_hidden = n_linear - 1
    assert params[-1][0].shape[0] == 1, "last layer must have out_dim == 1"

    mm_np = np.dtype(matmul_dtype)
    pack = max(8, 32 // mm_np.itemsize)      # sublane packing: 16 for bf16, 8 for f32
    exact_f32 = mm_np == np.dtype(np.float32)
    precision = jax.lax.Precision.HIGHEST if exact_f32 else None

    # ---- pad + orient parameters (setup-time only; weights are tiny).
    # Zero padding keeps the math exact: padded units get 0 pre-activation,
    # ELU(0) == 0, and the next layer's padded weight columns are 0.
    flat_params = []
    prev_pad = F            # first contraction dim == raw feature dim (x is unpadded)
    prev_raw = F
    for (w, b) in params[:-1]:
        d_out, d_in = w.shape
        assert d_in == prev_raw, "layer input dim mismatch"
        d_out_pad = _round_up(d_out, pack)
        w_p = (jnp.zeros((d_out_pad, prev_pad), jnp.float32)
               .at[:d_out, :d_in].set(jnp.asarray(w, jnp.float32))
               .astype(matmul_dtype))
        b_p = jnp.zeros((d_out_pad, 1), jnp.float32).at[:d_out, 0].set(
            jnp.asarray(b, jnp.float32))
        flat_params += [w_p, b_p]
        prev_pad, prev_raw = d_out_pad, d_out

    w_last, b_last = params[-1]
    assert w_last.shape[1] == prev_raw
    use_mxu_last = prev_pad >= 128
    if use_mxu_last:
        wl = (jnp.zeros((1, prev_pad), jnp.float32)
              .at[0, :prev_raw].set(jnp.asarray(w_last[0], jnp.float32))
              .astype(matmul_dtype))
    else:
        wl = jnp.zeros((prev_pad, 1), jnp.float32).at[:prev_raw, 0].set(
            jnp.asarray(w_last[0], jnp.float32))
    bl = jnp.asarray(b_last, jnp.float32).reshape(1, 1)
    flat_params += [wl, bl]

    # ---- choose block_m from a VMEM budget + chip generation.
    vmem_cap, megacore = _chip_profile()
    lane = 128
    in_isz = np.dtype(feature.dtype).itemsize
    Fp_lane = _round_up(F, lane)             # VMEM lane footprint of one x row
    maxH_pad = max([_round_up(p[0].shape[0], pack) for p in params[:-1]] + [8])
    per_lane = (2 * Fp_lane * in_isz                     # double-buffered x stream
                + 2 * 8 * 4                              # double-buffered out block
                + 4 * (_round_up(F, 8) + 3 * maxH_pad))  # live f32 intermediates (rough)
    budget = min(24 << 20, max(4 << 20, vmem_cap // 3))
    bm_cap = max(lane, min(8192, (budget // per_lane) // lane * lane))

    B8 = _round_up(B, 8)
    if block_m is not None:
        bm = _round_up(int(block_m), lane)
    elif B8 <= 256 and B8 <= bm_cap:
        bm = B8                              # tiny batch: one step, full-dim blocks
    elif (not megacore) and B8 <= bm_cap:
        bm = B8                              # single-TC chip: no megacore to feed
    elif megacore:
        g = 2                                # even split across the two TensorCores
        while _round_up(pl.cdiv(B, g), lane) > bm_cap:
            g += 2
        bm = _round_up(pl.cdiv(B, g), lane)
    else:
        bm = bm_cap

    B_pad = _round_up(B, bm)
    grid = (B_pad // bm,)

    x = feature
    if B_pad > B:
        # Zero rows propagate finite values through the MLP and are sliced off.
        x = jnp.pad(x, ((0, B_pad - B), (0, 0)))

    # ---- BlockSpecs: x streamed row-major; params full-array & VMEM-resident.
    in_specs = [pl.BlockSpec((bm, F), lambda i: (i, 0))]
    for p in flat_params:
        in_specs.append(pl.BlockSpec(p.shape, lambda i: (0, 0)))
    out_specs = pl.BlockSpec((1, bm), lambda i: (0, i))

    kernel = _make_mlp_kernel(n_hidden, matmul_dtype, use_mxu_last, precision)

    # ---- advisory cost estimate + explicit VMEM limit.
    dims = [F] + [p[0].shape[0] for p in params]
    flops = 2 * B_pad * sum(a * b for a, b in zip(dims[:-1], dims[1:]))
    transcendentals = B_pad * sum(dims[1:-1])
    param_bytes = sum(int(p.size) * np.dtype(p.dtype).itemsize for p in flat_params)
    bytes_accessed = int(B_pad * F * in_isz + param_bytes
                         + B_pad * np.dtype(out_dtype).itemsize)
    est_vmem = (2 * bm * Fp_lane * in_isz + 2 * 8 * bm * 4 + 2 * param_bytes
                + 4 * bm * (_round_up(F, 8) + 3 * maxH_pad) + (4 << 20))
    vmem_limit = int(min(max(est_vmem, 32 << 20), max(vmem_cap - (4 << 20), 32 << 20)))

    out = pl.pallas_call(
        kernel,
        out_shape=jax.ShapeDtypeStruct((1, B_pad), out_dtype),
        grid_spec=pltpu.PrefetchScalarGridSpec(
            num_scalar_prefetch=0,
            grid=grid,
            in_specs=in_specs,
            out_specs=out_specs,
        ),
        compiler_params=pltpu.CompilerParams(
            dimension_semantics=("parallel",),
            vmem_limit_bytes=vmem_limit,
        ),
        cost_estimate=pl.CostEstimate(
            flops=int(flops),
            transcendentals=int(transcendentals),
            bytes_accessed=bytes_accessed,
        ),
    )(x, *flat_params)

    return out[0, :B].reshape(B, 1)


def init_vnet_params(key, feature_dim, hidden_size, hidden_layers):
    """PyTorch nn.Linear layout/init: W [out, in], b [out], U(-1/sqrt(fan_in), +)."""
    dims = [feature_dim] + [hidden_size] * hidden_layers + [1]
    params = []
    for d_in, d_out in zip(dims[:-1], dims[1:]):
        key, kw, kb = jax.random.split(key, 3)
        bound = 1.0 / math.sqrt(d_in)
        w = jax.random.uniform(kw, (d_out, d_in), jnp.float32, -bound, bound)
        b = jax.random.uniform(kb, (d_out,), jnp.float32, -bound, bound)
        params.append((w, b))
    return params


def vnet_reference(feature, params, matmul_dtype=jnp.float32, *, precision=None,
                   cast_last=False):
    """Pure-JAX reference of the same MLP (optionally with bf16 MXU operands)."""
    h = feature.astype(jnp.float32)
    n = len(params)
    for i, (w, b) in enumerate(params):
        last = i == n - 1
        if (not last) or cast_last:
            lhs, rhs = h.astype(matmul_dtype), w.T.astype(matmul_dtype)
        else:
            lhs, rhs = h, w.T
        h = jnp.dot(lhs, rhs, preferred_element_type=jnp.float32,
                    precision=precision) + jnp.asarray(b, jnp.float32)[None, :]
        if not last:
            h = jnp.where(h > 0, h, jnp.exp(jnp.minimum(h, 0.0)) - 1.0)
    return h


if __name__ == "__main__":
    key = jax.random.PRNGKey(0)
    HI = jax.lax.Precision.HIGHEST

    # --- config 1: small shapes consistent with VNet(feature_dim, hidden, layers).
    batch, feature_dim, hidden_size, hidden_layers = 16, 32, 32, 2
    key, kx, kp = jax.random.split(key, 3)
    feature = jax.random.normal(kx, (batch, feature_dim), jnp.float32)
    params = init_vnet_params(kp, feature_dim, hidden_size, hidden_layers)

    out = jax.block_until_ready(vnet_forward(feature, params))        # bf16 MXU path
    assert out.shape == (batch, 1), out.shape
    ref_bf16 = vnet_reference(feature, params, matmul_dtype=jnp.bfloat16)
    ref_f32 = vnet_reference(feature, params, precision=HI)
    assert jnp.allclose(out, ref_bf16, atol=2e-3, rtol=2e-3), (
        float(jnp.max(jnp.abs(out - ref_bf16))))
    assert jnp.allclose(out, ref_f32, atol=5e-2, rtol=5e-2)

    out_f32 = jax.block_until_ready(                                  # exact-f32 path
        vnet_forward(feature, params, matmul_dtype=jnp.float32))
    assert jnp.allclose(out_f32, ref_f32, atol=1e-4, rtol=1e-4), (
        float(jnp.max(jnp.abs(out_f32 - ref_f32))))

    # --- config 2: exercises the MXU out_dim==1 head (hidden >= 128), batch
    # --- padding, and (via block_m override) the multi-step pipelined grid.
    batch2, feature_dim2, hidden_size2, hidden_layers2 = 300, 48, 128, 2
    key, kx2, kp2 = jax.random.split(key, 3)
    feature2 = jax.random.normal(kx2, (batch2, feature_dim2), jnp.float32)
    params2 = init_vnet_params(kp2, feature_dim2, hidden_size2, hidden_layers2)

    ref2_bf16 = vnet_reference(feature2, params2, matmul_dtype=jnp.bfloat16,
                               cast_last=True)
    ref2_f32 = vnet_reference(feature2, params2, precision=HI)

    out2 = jax.block_until_ready(vnet_forward(feature2, params2))
    assert out2.shape == (batch2, 1), out2.shape
    assert jnp.allclose(out2, ref2_bf16, atol=5e-3, rtol=5e-3), (
        float(jnp.max(jnp.abs(out2 - ref2_bf16))))
    assert jnp.allclose(out2, ref2_f32, atol=5e-2, rtol=5e-2)

    out2_tiled = jax.block_until_ready(
        vnet_forward(feature2, params2, block_m=128))                 # grid > 1
    assert jnp.allclose(out2_tiled, ref2_bf16, atol=5e-3, rtol=5e-3)

    out2_f32 = jax.block_until_ready(
        vnet_forward(feature2, params2, matmul_dtype=jnp.float32, block_m=256))
    assert jnp.allclose(out2_f32, ref2_f32, atol=1e-4, rtol=1e-4), (
        float(jnp.max(jnp.abs(out2_f32 - ref2_f32))))

    print("KERNEL_OK")
</pallas_src>

<mosaic_0001>
module attributes {stable_mosaic.version = 11 : i64} {
  func.func @kernel(%arg0: i32, %arg1: memref<16x32xf32, #tpu.memory_space<vmem>>, %arg2: memref<32x32xbf16, #tpu.memory_space<vmem>>, %arg3: memref<32x1xf32, #tpu.memory_space<vmem>>, %arg4: memref<32x32xbf16, #tpu.memory_space<vmem>>, %arg5: memref<32x1xf32, #tpu.memory_space<vmem>>, %arg6: memref<32x1xf32, #tpu.memory_space<vmem>>, %arg7: memref<1x1xf32, #tpu.memory_space<vmem>>, %arg8: memref<1x16xf32, #tpu.memory_space<vmem>>) attributes {dimension_semantics = [#tpu.dimension_semantics<parallel>], iteration_bounds = array<i64: 1>, scalar_prefetch = 0 : i64, scratch_operands = 0 : i64, tpu.core_type = #tpu.core_type<tc>, window_params = [{transform_indices = @transform_0, window_bounds = array<i64: 16, 32>}, {pipeline_mode = #tpu.pipeline_mode<synchronous>, transform_indices = @transform_1, window_bounds = array<i64: 32, 32>}, {pipeline_mode = #tpu.pipeline_mode<synchronous>, transform_indices = @transform_2, window_bounds = array<i64: 32, 1>}, {pipeline_mode = #tpu.pipeline_mode<synchronous>, transform_indices = @transform_3, window_bounds = array<i64: 32, 32>}, {pipeline_mode = #tpu.pipeline_mode<synchronous>, transform_indices = @transform_4, window_bounds = array<i64: 32, 1>}, {pipeline_mode = #tpu.pipeline_mode<synchronous>, transform_indices = @transform_5, window_bounds = array<i64: 32, 1>}, {pipeline_mode = #tpu.pipeline_mode<synchronous>, transform_indices = @transform_6, window_bounds = array<i64: 1, 1>}, {transform_indices = @transform_7, window_bounds = array<i64: 1, 16>}]} {
    %c0 = arith.constant 0 : index
    %c0_0 = arith.constant 0 : index
    %0 = vector.load %arg1[%c0, %c0_0] : memref<16x32xf32, #tpu.memory_space<vmem>>, vector<16x32xf32>
    %1 = tpu.transpose %0, [1, 0] : vector<16x32xf32> -> vector<32x16xf32>
    %2 = arith.truncf %1 : vector<32x16xf32> to vector<32x16xbf16>
    %c0_1 = arith.constant 0 : index
    %c0_2 = arith.constant 0 : index
    %3 = vector.load %arg2[%c0_1, %c0_2] : memref<32x32xbf16, #tpu.memory_space<vmem>>, vector<32x32xbf16>
    %c0_3 = arith.constant 0 : index
    %c0_4 = arith.constant 0 : index
    %4 = vector.load %arg3[%c0_3, %c0_4] : memref<32x1xf32, #tpu.memory_space<vmem>>, vector<32x1xf32>
    %cst = arith.constant dense<0.000000e+00> : vector<32x16xf32>
    %5 = tpu.matmul %3, %2, %cst {dimension_numbers = #tpu.dot_dimension_numbers<[1], [0], [0], [1], [0, 0, 1, 1], [], []>} : vector<32x32xbf16>, vector<32x16xbf16>, vector<32x16xf32> -> vector<32x16xf32>
    %6 = vector.broadcast %4 : vector<32x1xf32> to vector<32x16xf32>
    %7 = arith.addf %5, %6 : vector<32x16xf32>
    %cst_5 = arith.constant 0.000000e+00 : f32
    %8 = vector.broadcast %cst_5 : f32 to vector<32x16xf32>
    %9 = arith.cmpf ogt, %7, %8 : vector<32x16xf32>
    %cst_6 = arith.constant 0.000000e+00 : f32
    %10 = vector.broadcast %cst_6 : f32 to vector<32x16xf32>
    %11 = arith.minimumf %7, %10 : vector<32x16xf32>
    %12 = math.exp %11 : vector<32x16xf32>
    %cst_7 = arith.constant 1.000000e+00 : f32
    %13 = vector.broadcast %cst_7 : f32 to vector<32x16xf32>
    %14 = arith.subf %12, %13 : vector<32x16xf32>
    %15 = arith.select %9, %7, %14 : vector<32x16xi1>, vector<32x16xf32>
    %16 = arith.truncf %15 : vector<32x16xf32> to vector<32x16xbf16>
    %c0_8 = arith.constant 0 : index
    %c0_9 = arith.constant 0 : index
    %17 = vector.load %arg4[%c0_8, %c0_9] : memref<32x32xbf16, #tpu.memory_space<vmem>>, vector<32x32xbf16>
    %c0_10 = arith.constant 0 : index
    %c0_11 = arith.constant 0 : index
    %18 = vector.load %arg5[%c0_10, %c0_11] : memref<32x1xf32, #tpu.memory_space<vmem>>, vector<32x1xf32>
    %cst_12 = arith.constant dense<0.000000e+00> : vector<32x16xf32>
    %19 = tpu.matmul %17, %16, %cst_12 {dimension_numbers = #tpu.dot_dimension_numbers<[1], [0], [0], [1], [0, 0, 1, 1], [], []>} : vector<32x32xbf16>, vector<32x16xbf16>, vector<32x16xf32> -> vector<32x16xf32>
    %20 = vector.broadcast %18 : vector<32x1xf32> to vector<32x16xf32>
    %21 = arith.addf %19, %20 : vector<32x16xf32>
    %cst_13 = arith.constant 0.000000e+00 : f32
    %22 = vector.broadcast %cst_13 : f32 to vector<32x16xf32>
    %23 = arith.cmpf ogt, %21, %22 : vector<32x16xf32>
    %cst_14 = arith.constant 0.000000e+00 : f32
    %24 = vector.broadcast %cst_14 : f32 to vector<32x16xf32>
    %25 = arith.minimumf %21, %24 : vector<32x16xf32>
    %26 = math.exp %25 : vector<32x16xf32>
    %cst_15 = arith.constant 1.000000e+00 : f32
    %27 = vector.broadcast %cst_15 : f32 to vector<32x16xf32>
    %28 = arith.subf %26, %27 : vector<32x16xf32>
    %29 = arith.select %23, %21, %28 : vector<32x16xi1>, vector<32x16xf32>
    %c0_16 = arith.constant 0 : index
    %c0_17 = arith.constant 0 : index
    %30 = vector.load %arg6[%c0_16, %c0_17] : memref<32x1xf32, #tpu.memory_space<vmem>>, vector<32x1xf32>
    %c0_18 = arith.constant 0 : index
    %c0_19 = arith.constant 0 : index
    %31 = vector.load %arg7[%c0_18, %c0_19] : memref<1x1xf32, #tpu.memory_space<vmem>>, vector<1x1xf32>
    %32 = vector.broadcast %30 : vector<32x1xf32> to vector<32x16xf32>
    %33 = arith.mulf %29, %32 : vector<32x16xf32>
    %cst_20 = arith.constant dense<0.000000e+00> : vector<16xf32>
    %34 = vector.multi_reduction <add>, %33, %cst_20 [0] : vector<32x16xf32> to vector<16xf32>
    %35 = vector.shape_cast %34 : vector<16xf32> to vector<1x16xf32>
    %36 = vector.broadcast %31 : vector<1x1xf32> to vector<1x16xf32>
    %37 = arith.addf %35, %36 : vector<1x16xf32>
    %c0_21 = arith.constant 0 : index
    %c0_22 = arith.constant 0 : index
    %38 = vector.load %arg8[%c0_21, %c0_22] : memref<1x16xf32, #tpu.memory_space<vmem>>, vector<1x16xf32>
    tpu.vector_store %arg8[%c0_21, %c0_22], %37 {strides = array<i32>} : memref<1x16xf32, #tpu.memory_space<vmem>>, vector<1x16xf32>,
    return
  }
  func.func @transform_0(%arg0: i32) -> (i32, i32) {
    %c0_i32 = arith.constant 0 : i32
    %c0_i32_0 = arith.constant 0 : i32
    return %arg0, %c0_i32 : i32, i32
  }
  func.func @transform_1(%arg0: i32) -> (i32, i32) {
    %c0_i32 = arith.constant 0 : i32
    %c0_i32_0 = arith.constant 0 : i32
    %c0_i32_1 = arith.constant 0 : i32
    return %c0_i32, %c0_i32_0 : i32, i32
  }
  func.func @transform_2(%arg0: i32) -> (i32, i32) {
    %c0_i32 = arith.constant 0 : i32
    %c0_i32_0 = arith.constant 0 : i32
    %c0_i32_1 = arith.constant 0 : i32
    return %c0_i32, %c0_i32_0 : i32, i32
  }
  func.func @transform_3(%arg0: i32) -> (i32, i32) {
    %c0_i32 = arith.constant 0 : i32
    %c0_i32_0 = arith.constant 0 : i32
    %c0_i32_1 = arith.constant 0 : i32
    return %c0_i32, %c0_i32_0 : i32, i32
  }
  func.func @transform_4(%arg0: i32) -> (i32, i32) {
    %c0_i32 = arith.constant 0 : i32
    %c0_i32_0 = arith.constant 0 : i32
    %c0_i32_1 = arith.constant 0 : i32
    return %c0_i32, %c0_i32_0 : i32, i32
  }
  func.func @transform_5(%arg0: i32) -> (i32, i32) {
    %c0_i32 = arith.constant 0 : i32
    %c0_i32_0 = arith.constant 0 : i32
    %c0_i32_1 = arith.constant 0 : i32
    return %c0_i32, %c0_i32_0 : i32, i32
  }
  func.func @transform_6(%arg0: i32) -> (i32, i32) {
    %c0_i32 = arith.constant 0 : i32
    %c0_i32_0 = arith.constant 0 : i32
    %c0_i32_1 = arith.constant 0 : i32
    return %c0_i32, %c0_i32_0 : i32, i32
  }
  func.func @transform_7(%arg0: i32) -> (i32, i32) {
    %c0_i32 = arith.constant 0 : i32
    %c0_i32_0 = arith.constant 0 : i32
    return %c0_i32, %arg0 : i32, i32
  }
}

</mosaic_0001>

<llo_original>
// kernel: tpu_custom_call.1
$region0: #{tpu_custom_call.1}
  #allocation0 [shape = 'u32[]', space=smem, size = 0x4, offset = 0x4, fixed_abs, tag = 'smem constant byte address 0x4 - core index']
  #allocation1 [shape = 'u32[72,128]{1,0:T(1,128)}', space=vmem, size = 0x9000, scoped, tag = 'internal scratch']
  #allocation2 [shape = 'f32[1,1]{1,0:T(1,128)S(1)}', space=vmem, size = 0x200, scoped, tag = 'scoped memory for tpu_custom_call.1']
  %s0 = inlined_call_operand.vmem [shape: f32[16,32], index: 0, kind: input, shape index: {}]
  %s1 = inlined_call_operand.vmem [shape: bf16[32,32], index: 1, kind: input, shape index: {}]
  %s2 = inlined_call_operand.vmem [shape: f32[32,1], index: 2, kind: input, shape index: {}]
  %s3 = inlined_call_operand.vmem [shape: bf16[32,32], index: 3, kind: input, shape index: {}]
  %s4 = inlined_call_operand.vmem [shape: f32[32,1], index: 4, kind: input, shape index: {}]
  %s5 = inlined_call_operand.vmem [shape: f32[32,1], index: 5, kind: input, shape index: {}]
  %s6 = inlined_call_operand.<no memory space> [shape: f32[1,1], index: 6, kind: input, shape index: {}]
  %s7 = inlined_call_operand.hbm [shape: f32[1,16], index: 7, kind: output, shape index: {}]
  %s8 = sld [smem:[#allocation0]]
  $region38: #{tpu_custom_call.1} parent=0
    _
  %s10 = ssub.s32 1, %s8
  %s11 = scalar_select 0, %s10, %s8
  %v12 = vstv %s6
  %13 = vst [vmem:[#allocation2] sm:$0x1] %v12
  $region1: #{tpu_custom_call.1} parent=0
    #allocation3 [shape = 'u8[512]{0}', space=vmem, size = 0x400, scoped, tag = 'output window, operand 0, single buffered']
    #allocation4 [shape = 's32[1]{0}', space=sflag, size = 0x4, scoped, tag = 'scoped memory for tpu_custom_call.1']
    %14 = vsyncpa [#allocation4], 0
    // Predicated region
    $region2: #{tpu_custom_call.1} parent=1 // pred_check
      _
    $region3: #{tpu_custom_call.1} parent=1 // pred_check_branch
      %16 = sbr.rel (0) target = $region5
    $region4: #{tpu_custom_call.1} parent=1 // pred_region
      _
    $region5: #{tpu_custom_call.1} parent=1 // pred_fallthru
      _
    // Predicated region
    $region6: #{tpu_custom_call.1} parent=1 // pred_check
      _
    $region7: #{tpu_custom_call.1} parent=1 // pred_check_branch
      %18 = sbr.rel (0) target = $region9
    $region8: #{tpu_custom_call.1} parent=1 // pred_region
      _
    $region9: #{tpu_custom_call.1} parent=1 // pred_fallthru
      _
    // Predicated region
    $region10: #{tpu_custom_call.1} parent=1 // pred_check
      _
    $region11: #{tpu_custom_call.1} parent=1 // pred_check_branch
      %20 = sbr.rel (0) target = $region13
    $region12: #{tpu_custom_call.1} parent=1 // pred_region
      _
    $region13: #{tpu_custom_call.1} parent=1 // pred_fallthru
      _
    // Predicated region
    $region14: #{tpu_custom_call.1} parent=1 // pred_check
      _
    $region15: #{tpu_custom_call.1} parent=1 // pred_check_branch
      %22 = sbr.rel (0) target = $region17
    $region16: #{tpu_custom_call.1} parent=1 // pred_region
      _
    $region17: #{tpu_custom_call.1} parent=1 // pred_fallthru
      _
    // Predicated region
    $region18: #{tpu_custom_call.1} parent=1 // pred_check
      _
    $region19: #{tpu_custom_call.1} parent=1 // pred_check_branch
      %24 = sbr.rel (0) target = $region21
    $region20: #{tpu_custom_call.1} parent=1 // pred_region
      _
    $region21: #{tpu_custom_call.1} parent=1 // pred_fallthru
      _
    // Predicated region
    $region22: #{tpu_custom_call.1} parent=1 // pred_check
      _
    $region23: #{tpu_custom_call.1} parent=1 // pred_check_branch
      %26 = sbr.rel (0) target = $region25
    $region24: #{tpu_custom_call.1} parent=1 // pred_region
      _
    $region25: #{tpu_custom_call.1} parent=1 // pred_fallthru
      _
    // Predicated region
    $region26: #{tpu_custom_call.1} parent=1 // pred_check
      _
    $region27: #{tpu_custom_call.1} parent=1 // pred_check_branch
      %28 = sbr.rel (0) target = $region29
    $region28: #{tpu_custom_call.1} parent=1 // pred_region
      _
    $region29: #{tpu_custom_call.1} parent=1 // pred_fallthru
      _
    %v30 = vld [vmem:[%s0] sm:$0xff]
    %v31 = vld [vmem:[%s0 + $0x8] sm:$0xff]
    %32 = vxpose.xlu0.b32.start [1/16] %v30, 128
    %33 = vxpose.xlu0.b32.cont [2/16] %v31, 128
    %34 = vxpose.xlu0.b32.cont [3/16] 0.0, 128
    %35 = vxpose.xlu0.b32.cont [4/16] 0.0, 128
    %36 = vxpose.xlu0.b32.cont [5/16] 0.0, 128
    %37 = vxpose.xlu0.b32.cont [6/16] 0.0, 128
    %38 = vxpose.xlu0.b32.cont [7/16] 0.0, 128
    %39 = vxpose.xlu0.b32.cont [8/16] 0.0, 128
    %40 = vxpose.xlu0.b32.cont [9/16] 0.0, 128
    %41 = vxpose.xlu0.b32.cont [10/16] 0.0, 128
    %42 = vxpose.xlu0.b32.cont [11/16] 0.0, 128
    %43 = vxpose.xlu0.b32.cont [12/16] 0.0, 128
    %44 = vxpose.xlu0.b32.cont [13/16] 0.0, 128
    %45 = vxpose.xlu0.b32.cont [14/16] 0.0, 128
    %46 = vxpose.xlu0.b32.cont [15/16] 0.0, 128
    %47 = vxpose.xlu0.b32.end [16/16] 0.0, 128
    %v48 = vpop.trf.xlu0
    %v49 = vpop.trf.xlu0
    %v50 = vpop.trf.xlu0
    %v51 = vpop.trf.xlu0
    %v52 = vpop.trf.xlu0
    %v53 = vpop.trf.xlu0
    %v54 = vpop.trf.xlu0
    %v55 = vpop.trf.xlu0
    %v56 = vpop.trf.xlu0
    %v57 = vpop.trf.xlu0
    %v58 = vpop.trf.xlu0
    %v59 = vpop.trf.xlu0
    %v60 = vpop.trf.xlu0
    %v61 = vpop.trf.xlu0
    %v62 = vpop.trf.xlu0
    %v63 = vpop.trf.xlu0
    %v64 = vpack.c.bf16 %v49, %v48
    %v65 = vpack.c.bf16 %v51, %v50
    %v66 = vld [vmem:[%s1] sm:$0xf]
    %v67 = vld [vmem:[%s1 + $0x4] sm:$0xf]
    %v68 = vld [vmem:[%s1 + $0x8] sm:$0xf]
    %v69 = vld [vmem:[%s1 + $0xc] sm:$0xf]
    %v70 = vld [vmem:[%s2] sm:$0xff]
    %v71 = vld [vmem:[%s2 + $0x8] sm:$0xff]
    %v72 = vld [vmem:[%s2 + $0x10] sm:$0xff]
    %v73 = vld [vmem:[%s2 + $0x18] sm:$0xff]
    %75 = vset.pattern.permute.xlu0 0
    %76 = vperm.xlu0 %75, %v70
    %v77 = vpop.permute.xlu0 %76
    %80 = vset.pattern.permute.xlu0 0
    %81 = vperm.xlu0 %80, %v71
    %v82 = vpop.permute.xlu0 %81
    %85 = vset.pattern.permute.xlu0 0
    %86 = vperm.xlu0 %85, %v72
    %v87 = vpop.permute.xlu0 %86
    %90 = vset.pattern.permute.xlu0 0
    %91 = vperm.xlu0 %90, %v73
    %v92 = vpop.permute.xlu0 %91
    %v98 = vunpack.c.l.b16 %v66
    %v99 = vunpack.c.l.b16 %v67
    %v100 = vunpack.c.l.b16 %v68
    %v101 = vunpack.c.l.b16 %v69
    %v102 = vpack.c.b16 %v99, %v98
    %v103 = vpack.c.b16 %v101, %v100
    %vm104 = vcmask 261120
    %v106 = vsel %vm104, %v102, 0
    %v109 = vsel %vm104, %v103, 0
    %111 = vmatpush.bf16.msra.mxu0 0
    %112 = vmatpush.bf16.msra.mxu0 0
    %113 = vmatpush.bf16.msra.mxu0 0
    %114 = vmatpush.bf16.msra.mxu0 0
    %115 = vmatpush.bf16.msra.mxu0 0
    %116 = vmatpush.bf16.msra.mxu0 0
    %117 = vmatpush.bf16.msra.mxu0 %v65
    %118 = vmatpush.bf16.msra.mxu0 %v64
    %119 = vmatmul.bf16.gmra.mxu0 %v106
    %v120 = vpop.f32.mrf.mxu0
    %v121 = vadd.f32 %v77, %v120
    %v122 = vpop.f32.mrf.mxu0
    %v123 = vadd.f32 %v82, %v122
    %124 = vmatmul.bf16.gmra.mxu0 %v109
    %v125 = vpop.f32.mrf.mxu0
    %v126 = vadd.f32 %v87, %v125
    %v127 = vpop.f32.mrf.mxu0
    %v128 = vadd.f32 %v92, %v127
    %129 = vdwg.mxu0
    %vm130 = vcmp.gt.f32.partialorder %v121, 0.0
    %vm131 = vcmp.gt.f32.partialorder %v123, 0.0
    %vm132 = vcmp.gt.f32.partialorder %v126, 0.0
    %vm133 = vcmp.gt.f32.partialorder %v128, 0.0
    %v134 = vmin.f32 %v121, 0.0
    %v135 = vmin.f32 %v123, 0.0
    %v136 = vmin.f32 %v126, 0.0
    %v137 = vmin.f32 %v128, 0.0
    %v138 = vmul.f32 %v134, 1.442695
    %v139 = vpow.pop %v138
    %v140 = vmul.f32 %v135, 1.442695
    %v141 = vpow.pop %v140
    %v142 = vmul.f32 %v136, 1.442695
    %v143 = vpow.pop %v142
    %v144 = vmul.f32 %v137, 1.442695
    %v145 = vpow.pop %v144
    %v146 = vsub.f32 %v139, 1.0
    %v147 = vsub.f32 %v141, 1.0
    %v148 = vsub.f32 %v143, 1.0
    %v149 = vsub.f32 %v145, 1.0
    %v150 = vsel %vm130, %v121, %v146
    %v151 = vsel %vm131, %v123, %v147
    %v152 = vsel %vm132, %v126, %v148
    %v153 = vsel %vm133, %v128, %v149
    %v154 = vpack.c.bf16 %v151, %v150
    %v155 = vpack.c.bf16 %v153, %v152
    %v156 = vld [vmem:[%s3] sm:$0xf]
    %v157 = vld [vmem:[%s3 + $0x4] sm:$0xf]
    %v158 = vld [vmem:[%s3 + $0x8] sm:$0xf]
    %v159 = vld [vmem:[%s3 + $0xc] sm:$0xf]
    %v160 = vld [vmem:[%s4] sm:$0xff]
    %v161 = vld [vmem:[%s4 + $0x8] sm:$0xff]
    %v162 = vld [vmem:[%s4 + $0x10] sm:$0xff]
    %v163 = vld [vmem:[%s4 + $0x18] sm:$0xff]
    %165 = vset.pattern.permute.xlu0 0
    %166 = vperm.xlu0 %165, %v160
    %v167 = vpop.permute.xlu0 %166
    %170 = vset.pattern.permute.xlu0 0
    %171 = vperm.xlu0 %170, %v161
    %v172 = vpop.permute.xlu0 %171
    %175 = vset.pattern.permute.xlu0 0
    %176 = vperm.xlu0 %175, %v162
    %v177 = vpop.permute.xlu0 %176
    %180 = vset.pattern.permute.xlu0 0
    %181 = vperm.xlu0 %180, %v163
    %v182 = vpop.permute.xlu0 %181
    %v188 = vunpack.c.l.b16 %v156
    %v189 = vunpack.c.l.b16 %v157
    %v190 = vunpack.c.l.b16 %v158
    %v191 = vunpack.c.l.b16 %v159
    %v192 = vpack.c.b16 %v189, %v188
    %v193 = vpack.c.b16 %v191, %v190
    %v195 = vsel %vm104, %v192, 0
    %v198 = vsel %vm104, %v193, 0
    %200 = vmatpush.bf16.msra.mxu0 0
    %201 = vmatpush.bf16.msra.mxu0 0
    %202 = vmatpush.bf16.msra.mxu0 0
    %203 = vmatpush.bf16.msra.mxu0 0
    %204 = vmatpush.bf16.msra.mxu0 0
    %205 = vmatpush.bf16.msra.mxu0 0
    %206 = vmatpush.bf16.msra.mxu0 %v155
    %207 = vmatpush.bf16.msra.mxu0 %v154
    %208 = vmatmul.bf16.gmra.mxu0 %v195
    %v209 = vpop.f32.mrf.mxu0
    %v210 = vadd.f32 %v167, %v209
    %v211 = vpop.f32.mrf.mxu0
    %v212 = vadd.f32 %v172, %v211
    %213 = vmatmul.bf16.gmra.mxu0 %v198
    %v214 = vpop.f32.mrf.mxu0
    %v215 = vadd.f32 %v177, %v214
    %v216 = vpop.f32.mrf.mxu0
    %v217 = vadd.f32 %v182, %v216
    %218 = vdwg.mxu0
    %vm219 = vcmp.gt.f32.partialorder %v210, 0.0
    %vm220 = vcmp.gt.f32.partialorder %v212, 0.0
    %vm221 = vcmp.gt.f32.partialorder %v215, 0.0
    %vm222 = vcmp.gt.f32.partialorder %v217, 0.0
    %v223 = vmin.f32 %v210, 0.0
    %v224 = vmin.f32 %v212, 0.0
    %v225 = vmin.f32 %v215, 0.0
    %v226 = vmin.f32 %v217, 0.0
    %v227 = vmul.f32 %v223, 1.442695
    %v228 = vpow.pop %v227
    %v229 = vmul.f32 %v224, 1.442695
    %v230 = vpow.pop %v229
    %v231 = vmul.f32 %v225, 1.442695
    %v232 = vpow.pop %v231
    %v233 = vmul.f32 %v226, 1.442695
    %v234 = vpow.pop %v233
    %v235 = vsub.f32 %v228, 1.0
    %v236 = vsub.f32 %v230, 1.0
    %v237 = vsub.f32 %v232, 1.0
    %v238 = vsub.f32 %v234, 1.0
    %v239 = vsel %vm219, %v210, %v235
    %v240 = vsel %vm220, %v212, %v236
    %v241 = vsel %vm221, %v215, %v237
    %v242 = vsel %vm222, %v217, %v238
    %v243 = vld [vmem:[%s5] sm:$0xff]
    %v244 = vld [vmem:[%s5 + $0x8] sm:$0xff]
    %v245 = vld [vmem:[%s5 + $0x10] sm:$0xff]
    %v246 = vld [vmem:[%s5 + $0x18] sm:$0xff]
    %v247 = vld [vmem:[#allocation2] sm:$0x1]
    %249 = vset.pattern.permute.xlu0 0
    %250 = vperm.xlu0 %249, %v243
    %v251 = vpop.permute.xlu0 %250
    %254 = vset.pattern.permute.xlu0 0
    %255 = vperm.xlu0 %254, %v244
    %v256 = vpop.permute.xlu0 %255
    %259 = vset.pattern.permute.xlu0 0
    %260 = vperm.xlu0 %259, %v245
    %v261 = vpop.permute.xlu0 %260
    %264 = vset.pattern.permute.xlu0 0
    %265 = vperm.xlu0 %264, %v246
    %v266 = vpop.permute.xlu0 %265
    %v268 = vmul.f32 %v239, %v251
    %v269 = vmul.f32 %v240, %v256
    %v270 = vmul.f32 %v241, %v261
    %v271 = vmul.f32 %v242, %v266
    %vm272 = vcmask 130048
    %v273 = vsel %vm272, %v268, 0.0
    %v274 = vsel %vm272, %v269, 0.0
    %v275 = vadd.f32 %v273, %v274
    %v276 = vsel %vm272, %v270, 0.0
    %v277 = vadd.f32 %v275, %v276
    %v278 = vsel %vm272, %v271, 0.0
    %v279 = vadd.f32 %v277, %v278
    %v280 = vrot.slane %v279, 4
    %v281 = vadd.f32 %v279, %v280
    %v282 = vrot.slane %v281, 2
    %v283 = vadd.f32 %v281, %v282
    %v284 = vrot.slane %v283, 1
    %v285 = vadd.f32 %v283, %v284
    %287 = vset.pattern.permute.xlu0 0
    %288 = vperm.xlu0 %287, %v247
    %v289 = vpop.permute.xlu0 %288
    %v291 = vperm.slane %v289, 0
    %v292 = vadd.f32 %v285, %v291
    %vm293 = vcmask 122880
    %294 = vst.msk [vmem:[#allocation3] sm:$0x1] %vm293, %v292
    // Predicated region
    $region30: #{tpu_custom_call.1} parent=1 // pred_check
      _
    $region31: #{tpu_custom_call.1} parent=1 // pred_check_branch
      %296 = sbr.rel (0) target = $region33
    $region32: #{tpu_custom_call.1} parent=1 // pred_region
      %298 = vsyncadd [#allocation4], 0
      %s300 = sshll.u32 [#allocation3], 4
      %s301 = int_to_ptr.vmem [resolvable:$true] %s300
      %s302 = sshll.u32 %s7, 4
      %s303 = int_to_ptr.hbm [resolvable:$true] %s302
      %305 = dma.vmem_to_hbm [thread:$0]  %s301, 16, %s303, [#allocation4]
    $region33: #{tpu_custom_call.1} parent=1 // pred_fallthru
      _
    // Predicated region
    $region34: #{tpu_custom_call.1} parent=1 // pred_check
      _
    $region35: #{tpu_custom_call.1} parent=1 // pred_check_branch
      %307 = sbr.rel (0) target = $region37
    $region36: #{tpu_custom_call.1} parent=1 // pred_region
      %309 = dma.done [#allocation4], 16
    $region37: #{tpu_custom_call.1} parent=1 // pred_fallthru
      _
    %310 = vsyncpa [#allocation4], 1

</llo_original>
